<compile_context>
chip_gen: v6e
topology: v6e:2x2x1
jax: 0.10.0
libtpu: 0.0.40
codegen_flags: <defaults>
</compile_context>

<pallas_src>
import functools

import jax
import jax.numpy as jnp
from jax.experimental import pallas as pl
from jax.experimental.pallas import tpu as pltpu

_LANE = 128
_MIN_GRID_STEPS = 8                 # megacore / pipeline-depth target (v7x: 2 TCs)
_MIN_BLOCK_BYTES = 1 << 20          # don't shrink blocks below ~1 MiB when splitting
_MIN_SPLIT_TOTAL_BYTES = 4 << 20    # only force extra grid steps for non-tiny inputs


def _cdiv(a, b):
    return -(-a // b)


@functools.lru_cache(maxsize=None)
def _vmem_budgets():
    """Returns (per-block byte budget, vmem_limit_bytes), generation aware."""
    vmem = None
    try:
        vmem = pltpu.get_tpu_info().vmem_capacity_bytes
    except Exception:
        vmem = None
    if vmem is not None and vmem >= 96 * 1024 * 1024:
        # v5e / v6e class parts (128 MiB physical VMEM): bigger blocks, fewer steps.
        return 12 * 1024 * 1024, 64 * 1024 * 1024
    # v7x (64 MiB physical VMEM) or unknown: stay conservative.  Double-buffered
    # in+out pipeline is ~4x the block -> <= ~24 MiB working set under a 40 MiB cap.
    return 6 * 1024 * 1024, 40 * 1024 * 1024


def _choose_channel_tile(n, c, plane_bytes, block_budget):
    plane_bytes = max(plane_bytes, 1)
    ct = max(1, min(c, block_budget // plane_bytes))
    # Guarantee enough grid steps for megacore sharding + DMA/compute overlap
    # on non-trivial inputs, while keeping blocks well above per-step overhead.
    total_bytes = n * c * plane_bytes
    if total_bytes >= _MIN_SPLIT_TOTAL_BYTES and n * _cdiv(c, ct) < _MIN_GRID_STEPS:
        steps_per_batch = _cdiv(_MIN_GRID_STEPS, n)
        ct_split = max(1, _cdiv(c, steps_per_batch))
        ct_floor = max(1, _MIN_BLOCK_BYTES // plane_bytes)
        ct = min(ct, max(ct_split, ct_floor))
    # Keep the sublane dim of partial-channel blocks layout friendly.
    if ct < c and ct >= 8:
        ct = (ct // 8) * 8
    return ct


def _flat_shift_kernel(x_ref, o_ref, *, shift_flat, sw, w):
    """Roll on a lane-dense (ct, H*W) block.

    out2d[i, j] = in2d[(i - sh) % H, (j - sw) % W] is, on the flat axis:
    pre-select (for the last `sw` columns of each image row) the element W
    lanes later, then a single flat roll by shift_flat = sh*W + sw.
    """
    x = x_ref[...]
    nflat = x.shape[-1]
    if sw:
        # roll(x, -W): element one image-row later, same column, wrapping.
        down = jnp.concatenate([x[..., w:], x[..., :w]], axis=-1)
        col = jax.lax.broadcasted_iota(jnp.int32, x.shape, x.ndim - 1) % w
        x = jnp.where(col >= w - sw, down, x)
    if shift_flat:
        # Final flat roll as two direct strip stores (no full-block temporary).
        o_ref[..., :shift_flat] = x[..., nflat - shift_flat:]
        o_ref[..., shift_flat:] = x[..., :nflat - shift_flat]
    else:
        o_ref[...] = x


def _shift4d_kernel(x_ref, o_ref, *, sh, sw):
    """Roll of the trailing two axes of a (ct, H, W) block via direct quadrant
    stores into o_ref (no concat temporaries)."""
    x = x_ref[...]
    h, w = x.shape[-2], x.shape[-1]
    if sh and sw:
        o_ref[..., :sh, :sw] = x[..., h - sh:, w - sw:]
        o_ref[..., :sh, sw:] = x[..., h - sh:, :w - sw]
        o_ref[..., sh:, :sw] = x[..., :h - sh, w - sw:]
        o_ref[..., sh:, sw:] = x[..., :h - sh, :w - sw]
    elif sh:
        o_ref[..., :sh, :] = x[..., h - sh:, :]
        o_ref[..., sh:, :] = x[..., :h - sh, :]
    elif sw:
        o_ref[..., :, :sw] = x[..., :, w - sw:]
        o_ref[..., :, sw:] = x[..., :, :w - sw]
    else:
        o_ref[...] = x


def shift(x: jax.Array, shift_amt: int = 4, *, donate_input: bool = False) -> jax.Array:
    """Equivalent of torch.roll(x, shifts=(s, s), dims=(2, 3)) for NCHW x."""
    if x.ndim != 4:
        raise ValueError(f"expected NCHW input, got shape {x.shape}")
    n, c, h, w = x.shape
    sh = shift_amt % h
    sw = shift_amt % w
    if sh == 0 and sw == 0:
        return x

    itemsize = jnp.dtype(x.dtype).itemsize
    plane_bytes = h * w * itemsize
    block_budget, vmem_limit = _vmem_budgets()
    ct = _choose_channel_tile(n, c, plane_bytes, block_budget)

    compiler_params = pltpu.CompilerParams(
        dimension_semantics=("parallel", "parallel"),
        vmem_limit_bytes=vmem_limit,
    )
    cost = pl.CostEstimate(
        flops=0, transcendentals=0, bytes_accessed=int(2 * x.size * itemsize)
    )
    # Safe to alias: each grid step fully reads its input tile before the
    # identically-indexed output tile is written back.  Only beneficial when
    # the caller actually donates x (otherwise XLA inserts a defensive copy).
    io_alias = {0: 0} if donate_input else {}
    grid = (n, _cdiv(c, ct))

    use_flat = (w % _LANE != 0) and ((h * w) % _LANE == 0)

    if use_flat:
        # Lane-dense path: merge the contiguous trailing dims (free bitcast) so
        # the block's last dim is a multiple of 128.
        nflat = h * w
        shift_flat = (sh * w + sw) % nflat
        x_flat = x.reshape(n, c, nflat)
        spec = pl.BlockSpec((None, ct, nflat), lambda i, j: (i, j, 0))
        kernel = functools.partial(
            _flat_shift_kernel, shift_flat=shift_flat, sw=sw, w=w
        )
        out_flat = pl.pallas_call(
            kernel,
            out_shape=jax.ShapeDtypeStruct((n, c, nflat), x.dtype),
            grid=grid,
            in_specs=[spec],
            out_specs=spec,
            compiler_params=compiler_params,
            cost_estimate=cost,
            input_output_aliases=io_alias,
        )(x_flat)
        return out_flat.reshape(n, c, h, w)

    # Already lane-dense (W % 128 == 0) or un-flattenable (H*W not a multiple
    # of 128): keep (ct, H, W) blocks and roll with direct quadrant stores.
    spec = pl.BlockSpec((None, ct, h, w), lambda i, j: (i, j, 0, 0))
    kernel = functools.partial(_shift4d_kernel, sh=sh, sw=sw)
    return pl.pallas_call(
        kernel,
        out_shape=jax.ShapeDtypeStruct(x.shape, x.dtype),
        grid=grid,
        in_specs=[spec],
        out_specs=spec,
        compiler_params=compiler_params,
        cost_estimate=cost,
        input_output_aliases=io_alias,
    )(x)


if __name__ == "__main__":
    key = jax.random.PRNGKey(0)
    k0, k1 = jax.random.split(key)

    # Main test: exercises the lane-dense flat path (W=16 < 128, H*W=256).
    x = jax.random.normal(k0, (2, 4, 16, 16), dtype=jnp.float32)
    y = jax.block_until_ready(shift(x, shift_amt=4))
    y_ref = jnp.roll(x, shift=(4, 4), axis=(2, 3))
    assert y.shape == x.shape and y.dtype == x.dtype
    assert jnp.array_equal(y, y_ref), "flat-path mismatch vs jnp.roll reference"

    # Secondary test: exercises the (ct, H, W) quadrant-store path (W % 128 == 0).
    x2 = jax.random.normal(k1, (1, 2, 8, 128), dtype=jnp.float32)
    y2 = jax.block_until_ready(shift(x2, shift_amt=4))
    assert jnp.array_equal(
        y2, jnp.roll(x2, shift=(4, 4), axis=(2, 3))
    ), "4D-path mismatch vs jnp.roll reference"

    print("KERNEL_OK")
</pallas_src>

<mosaic_0001>
module attributes {stable_mosaic.version = 11 : i64} {
  func.func @_flat_shift_kernel(%arg0: i32, %arg1: i32, %arg2: memref<1x4x256xf32, #tpu.memory_space<vmem>>, %arg3: memref<1x4x256xf32, #tpu.memory_space<vmem>>) attributes {dimension_semantics = [#tpu.dimension_semantics<parallel>, #tpu.dimension_semantics<parallel>], iteration_bounds = array<i64: 2, 1>, scalar_prefetch = 0 : i64, scratch_operands = 0 : i64, tpu.core_type = #tpu.core_type<tc>, window_params = [{transform_indices = @transform_0, window_bounds = array<i64: 1, 4, 256>}, {transform_indices = @transform_1, window_bounds = array<i64: 1, 4, 256>}]} {
    %c0 = arith.constant 0 : index
    %c0_0 = arith.constant 0 : index
    %c0_1 = arith.constant 0 : index
    %0 = vector.load %arg2[%c0, %c0_0, %c0_1] : memref<1x4x256xf32, #tpu.memory_space<vmem>>, vector<1x4x256xf32>
    %1 = vector.shape_cast %0 : vector<1x4x256xf32> to vector<4x256xf32>
    %2 = vector.extract_strided_slice %1 {offsets = [0, 16], sizes = [4, 240], strides = [1, 1]} : vector<4x256xf32> to vector<4x240xf32>
    %3 = vector.extract_strided_slice %1 {offsets = [0, 0], sizes = [4, 16], strides = [1, 1]} : vector<4x256xf32> to vector<4x16xf32>
    %4 = tpu.concatenate %2, %3 in 1 : vector<4x240xf32>, vector<4x16xf32> -> vector<4x256xf32>
    %5 = tpu.iota {dimensions = array<i32: 1>} : vector<4x256xi32>
    %c16_i32 = arith.constant 16 : i32
    %c0_i32 = arith.constant 0 : i32
    %6 = arith.cmpi eq, %c16_i32, %c0_i32 : i32
    %c1_i32 = arith.constant 1 : i32
    %7 = arith.select %6, %c1_i32, %c16_i32 : i32
    %8 = vector.broadcast %7 : i32 to vector<4x256xi32>
    %9 = arith.remsi %5, %8 : vector<4x256xi32>
    %c0_i32_2 = arith.constant 0 : i32
    %10 = vector.broadcast %c0_i32_2 : i32 to vector<4x256xi32>
    %11 = arith.cmpi ne, %9, %10 : vector<4x256xi32>
    %c0_i32_3 = arith.constant 0 : i32
    %12 = vector.broadcast %c0_i32_3 : i32 to vector<4x256xi32>
    %13 = arith.cmpi slt, %9, %12 : vector<4x256xi32>
    %c0_i32_4 = arith.constant 0 : i32
    %14 = arith.cmpi slt, %7, %c0_i32_4 : i32
    %15 = vector.broadcast %14 : i1 to vector<4x256xi1>
    %16 = vector.broadcast %15 : vector<4x256xi1> to vector<4x256xi1>
    %17 = arith.xori %13, %16 : vector<4x256xi1>
    %18 = arith.andi %17, %11 : vector<4x256xi1>
    %19 = vector.broadcast %7 : i32 to vector<4x256xi32>
    %20 = arith.addi %9, %19 : vector<4x256xi32>
    %21 = arith.select %18, %20, %9 : vector<4x256xi1>, vector<4x256xi32>
    %c12_i32 = arith.constant 12 : i32
    %22 = vector.broadcast %c12_i32 : i32 to vector<4x256xi32>
    %23 = arith.cmpi sge, %21, %22 : vector<4x256xi32>
    %24 = arith.select %23, %4, %1 : vector<4x256xi1>, vector<4x256xf32>
    %25 = vector.extract_strided_slice %24 {offsets = [0, 188], sizes = [4, 68], strides = [1, 1]} : vector<4x256xf32> to vector<4x68xf32>
    %c0_5 = arith.constant 0 : index
    %c0_6 = arith.constant 0 : index
    %c0_7 = arith.constant 0 : index
    %26 = vector.load %arg3[%c0_5, %c0_6, %c0_7] : memref<1x4x256xf32, #tpu.memory_space<vmem>>, vector<1x4x68xf32>
    %27 = vector.shape_cast %26 : vector<1x4x68xf32> to vector<4x68xf32>
    %28 = vector.shape_cast %25 : vector<4x68xf32> to vector<1x4x68xf32>
    tpu.vector_store %arg3[%c0_5, %c0_6, %c0_7], %28 {strides = array<i32>} : memref<1x4x256xf32, #tpu.memory_space<vmem>>, vector<1x4x68xf32>,
    %29 = vector.extract_strided_slice %24 {offsets = [0, 0], sizes = [4, 188], strides = [1, 1]} : vector<4x256xf32> to vector<4x188xf32>
    %c0_8 = arith.constant 0 : index
    %c0_9 = arith.constant 0 : index
    %c68 = arith.constant 68 : index
    %30 = vector.load %arg3[%c0_8, %c0_9, %c68] : memref<1x4x256xf32, #tpu.memory_space<vmem>>, vector<1x4x188xf32>
    %31 = vector.shape_cast %30 : vector<1x4x188xf32> to vector<4x188xf32>
    %32 = vector.shape_cast %29 : vector<4x188xf32> to vector<1x4x188xf32>
    tpu.vector_store %arg3[%c0_8, %c0_9, %c68], %32 {strides = array<i32>} : memref<1x4x256xf32, #tpu.memory_space<vmem>>, vector<1x4x188xf32>,
    return
  }
  func.func @transform_0(%arg0: i32, %arg1: i32) -> (i32, i32, i32) {
    %c0_i32 = arith.constant 0 : i32
    %c0_i32_0 = arith.constant 0 : i32
    return %arg0, %arg1, %c0_i32 : i32, i32, i32
  }
  func.func @transform_1(%arg0: i32, %arg1: i32) -> (i32, i32, i32) {
    %c0_i32 = arith.constant 0 : i32
    %c0_i32_0 = arith.constant 0 : i32
    return %arg0, %arg1, %c0_i32 : i32, i32, i32
  }
}

</mosaic_0001>

<llo_original>
// kernel: tpu_custom_call.1
$region0: #{tpu_custom_call.1}
  #allocation0 [shape = 'u32[]', space=smem, size = 0x4, offset = 0x4, fixed_abs, tag = 'smem constant byte address 0x4 - core index']
  #allocation1 [shape = 'u32[144,128]{1,0:T(1,128)}', space=vmem, size = 0x12000, scoped, tag = 'internal scratch']
  %s0 = inlined_call_operand.hbm [shape: f32[2,4,256], index: 0, kind: input, shape index: {}]
  %s1 = inlined_call_operand.hbm [shape: f32[2,4,256], index: 1, kind: output, shape index: {}]
  %s2 = sld [smem:[#allocation0]]
  $region41: #{tpu_custom_call.1} parent=0
    _
  %s4 = ssub.s32 1, %s2
  %s5 = scalar_select 0, %s4, %s2
  $region1: #{tpu_custom_call.1} parent=0
    #allocation2 [shape = 'u8[8192]{0}', space=vmem, size = 0x2000, scoped, tag = 'input window, operand 0']
    #allocation3 [shape = 's32[2]{0}', space=sflag, size = 0x8, scoped, tag = 'scoped memory for tpu_custom_call.1']
    #allocation4 [shape = 's32[2]{0}', space=sflag, size = 0x8, scoped, tag = 'scoped memory for tpu_custom_call.1']
    #allocation5 [shape = 'u8[8192]{0}', space=vmem, size = 0x2000, scoped, tag = 'output window, operand 0']
    %6 = vsyncpa [#allocation3], 0
    %s7 = scalar_lea.sflag [#allocation3], 1
    %8 = vsyncpa %s7, 0
    %9 = vsyncpa [#allocation4], 0
    %s10 = scalar_lea.sflag [#allocation4], 1
    %11 = vsyncpa %s10, 0
    loop: start=0, step=1, limit=4
    $region2: #{tpu_custom_call.1} parent=1 // loop_pre_header
      _
    $region3: #{tpu_custom_call.1} parent=1 // loop_header
      %s13 = sphi 0, %s17
      %p14 = scmp.ge.s32.totalorder %s13, 4
      %s20 = sphi 0, %s32
      %s21 = sphi 0, %s28
      %s22 = sphi 0, %s20
      %s23 = sphi 0, %s21
      %s24 = sphi 0, %s22
      %s25 = sphi 0, %s23
      %s37 = sphi 0, %s39
      %s40 = sphi 0, %s37
      %s41 = sphi 0, %s40
      %s57 = sphi 0, %s41
      %s65 = sphi 0, %s67
      %s68 = sphi 0, %s65
      %s69 = sphi 0, %s68
      %s85 = sphi 0, %s69
    $region4: #{tpu_custom_call.1} parent=1 // loop_header_branch
      %16 = sbr.rel (%p14) target = $region8
    $region5: #{tpu_custom_call.1} parent=1 // loop_body
      %s18 = ssub.s32 %s13, 1
      %s19 = ssub.s32 %s13, 2
      %s26 = sadd.s32 1, %s21
      %p27 = scmp.ge.s32.totalorder %s26, 1
      %s28 = scalar_select %p27, 0, %s26
      %s29 = sadd.s32 1, %s20
      %s30 = scalar_select %p27, %s29, %s20
      %p31 = scmp.ge.s32.totalorder %s30, 2
      %s32 = scalar_select %p31, 0, %s30
      %s33 = ssub.s32 %s20, %s32
      %s34 = ssub.s32 %s21, %s28
      %s35 = sor.u32 %s33, %s34
      %p36 = scmp.eq.s32.totalorder %s35, 0
      %s38 = sadd.s32 %s37, 1
      %s39 = scalar_select %p36, %s37, %s38
      %p42 = pneg %p36
      %p43 = scmp.eq.s32.totalorder %s13, 1
      %p44 = por %p42, %p43
      %p45 = scmp.ne.s32.totalorder %s37, %s40
      %p46 = scmp.eq.s32.totalorder %s13, 0
      %p47 = por %p45, %p46
      %p48 = scmp.ne.s32.totalorder %s37, %s40
      %p49 = scmp.eq.s32.totalorder %s18, 1
      %p50 = por %p48, %p49
      %p51 = scmp.ne.s32.totalorder %s40, %s41
      %p52 = scmp.eq.s32.totalorder %s18, 0
      %p53 = por %p51, %p52
      %p54 = scmp.ne.s32.totalorder %s40, %s41
      %p55 = scmp.eq.s32.totalorder %s19, 1
      %p56 = por %p54, %p55
      %p58 = scmp.ne.s32.totalorder %s41, %s57
      %p59 = scmp.eq.s32.totalorder %s19, 0
      %p60 = por %p58, %p59
      %s61 = ssub.s32 %s20, %s32
      %s62 = ssub.s32 %s21, %s28
      %s63 = sor.u32 %s61, %s62
      %p64 = scmp.eq.s32.totalorder %s63, 0
      %s66 = sadd.s32 %s65, 1
      %s67 = scalar_select %p64, %s65, %s66
      %p70 = pneg %p64
      %p71 = scmp.eq.s32.totalorder %s13, 1
      %p72 = por %p70, %p71
      %p73 = scmp.ne.s32.totalorder %s65, %s68
      %p74 = scmp.eq.s32.totalorder %s13, 0
      %p75 = por %p73, %p74
      %p76 = scmp.ne.s32.totalorder %s65, %s68
      %p77 = scmp.eq.s32.totalorder %s18, 1
      %p78 = por %p76, %p77
      %p79 = scmp.ne.s32.totalorder %s68, %s69
      %p80 = scmp.eq.s32.totalorder %s18, 0
      %p81 = por %p79, %p80
      %p82 = scmp.ne.s32.totalorder %s68, %s69
      %p83 = scmp.eq.s32.totalorder %s19, 1
      %p84 = por %p82, %p83
      %p86 = scmp.ne.s32.totalorder %s69, %s85
      %p87 = scmp.eq.s32.totalorder %s19, 0
      %p88 = por %p86, %p87
      %p89 = scmp.le.s32.totalorder 1, %s13
      %p90 = scmp.lt.s32.totalorder %s13, 3
      %p91 = pnand %p89, %p90
      %p92 = pneg %p91
      // Predicated region
      $region9: #{tpu_custom_call.1} parent=5 // pred_check
        _
      $region10: #{tpu_custom_call.1} parent=5 // pred_check_branch
        %94 = sbr.rel (%p91) target = $region12
      $region11: #{tpu_custom_call.1} parent=5 // pred_region
        %s95 = ssub.s32 %s13, 1
      $region12: #{tpu_custom_call.1} parent=5 // pred_fallthru
        _
      %p96 = scmp.lt.s32.totalorder %s13, 2
      // Predicated region
      $region13: #{tpu_custom_call.1} parent=5 // pred_check
        %p97 = pneg %p96
      $region14: #{tpu_custom_call.1} parent=5 // pred_check_branch
        %99 = sbr.rel (%p97) target = $region16
      $region15: #{tpu_custom_call.1} parent=5 // pred_region
        // Predicated region
        $region17: #{tpu_custom_call.1} parent=15 // pred_check
          %p100 = pneg %p47
        $region18: #{tpu_custom_call.1} parent=15 // pred_check_branch
          %102 = sbr.rel (%p100) target = $region20
        $region19: #{tpu_custom_call.1} parent=15 // pred_region
          %s103 = sand.u32 %s37, 1
          %s104 = scalar_lea.sflag [#allocation3], %s103
          %s105 = sand.u32 %s37, 1
          %s106 = smul.addr %s105, 8
          %s107 = scalar_lea.vmem [#allocation2], %s106
          %s109 = ssub.s32 128, 128
          %110 = vsyncadd %s104, %s109
          %s111 = smul.addr %s21, 2
          %s112 = smul.addr %s20, 2
          %s113 = sadd.s32 %s111, %s112
          %s114 = smul.addr %s113, 64
          %s115 = scalar_lea.hbm %s0, %s114
          %s117 = sshll.u32 %s107, 4
          %s118 = int_to_ptr.vmem [resolvable:$true] %s117
          %120 = dma.hbm_to_vmem [thread:$0]  %s115, 128, %s118, %s104
        $region20: #{tpu_custom_call.1} parent=15 // pred_fallthru
          _
      $region16: #{tpu_custom_call.1} parent=5 // pred_fallthru
        _
      %p121 = scmp.le.s32.totalorder 1, %s13
      %p122 = scmp.lt.s32.totalorder %s13, 3
      %p123 = pnand %p121, %p122
      %p124 = pneg %p123
      // Predicated region
      $region21: #{tpu_custom_call.1} parent=5 // pred_check
        _
      $region22: #{tpu_custom_call.1} parent=5 // pred_check_branch
        %126 = sbr.rel (%p123) target = $region24
      $region23: #{tpu_custom_call.1} parent=5 // pred_region
        %s127 = ssub.s32 %s13, 1
        %s128 = sand.u32 %s40, 1
        %s129 = scalar_lea.sflag [#allocation3], %s128
        %s130 = sand.u32 %s40, 1
        %s131 = smul.addr %s130, 8
        %s132 = scalar_lea.vmem [#allocation2], %s131
        // Predicated region
        $region25: #{tpu_custom_call.1} parent=23 // pred_check
          %p133 = pneg %p53
        $region26: #{tpu_custom_call.1} parent=23 // pred_check_branch
          %135 = sbr.rel (%p133) target = $region28
        $region27: #{tpu_custom_call.1} parent=23 // pred_region
          %136 = dma.done %s129, 128
        $region28: #{tpu_custom_call.1} parent=23 // pred_fallthru
          _
        %s137 = sand.u32 %s40, 1
        %s138 = scalar_lea.sflag [#allocation3], %s137
        %s139 = sand.u32 %s40, 1
        %s140 = smul.addr %s139, 8
        %s141 = scalar_lea.vmem [#allocation2], %s140
        %p142 = pneg %p53
        %p143 = pneg %p50
        %p144 = pneg %p81
        %p145 = pneg %p78
        %s146 = sand.u32 %s68, 1
        %s147 = scalar_lea.sflag [#allocation4], %s146
        %s148 = sand.u32 %s68, 1
        %s149 = smul.addr %s148, 8
        %s150 = scalar_lea.vmem [#allocation5], %s149
        %v151 = vld [vmem:[%s132] sm:$0xff]
        %v153 = vcombine.high %v151, %v151
        %154 = vrot.lane.b32.xlu0 %v151, 112
        %v155 = vpop.permute.xlu0 %154
        %156 = vrot.lane.b32.xlu0 %v153, 112
        %v157 = vpop.permute.xlu0 %156
        %vm158 = vcmask 916480
        %v159 = vsel %vm158, %v155, %v157
        %v163 = vsel %vm158, %v157, %v155
        %v164 = vlaneseq
        %v165 = vand.u32 %v164, 127
        %v166 = vadd.s32 %v165, 128
        %vm167 = vcmp.lt.s32.totalorder %v165, 0
        %v168 = vsub.s32 0, %v165
        %v169 = vsel %vm167, %v168, %v165
        %v170 = vshrl.u32 %v169, 4
        %v171 = vand.u32 %v169, 15
        %v172 = vsub.s32 0, %v171
        %v173 = vsel %vm167, %v172, %v171
        %vm174 = vcmp.lt.s32.totalorder %v166, 0
        %v175 = vsub.s32 0, %v166
        %v176 = vsel %vm174, %v175, %v166
        %v177 = vshrl.u32 %v176, 4
        %v178 = vand.u32 %v176, 15
        %v179 = vsub.s32 0, %v178
        %v180 = vsel %vm174, %v179, %v178
        %vm181 = vcmp.ne.s32.totalorder %v173, 0
        %vm182 = vcmp.ne.s32.totalorder %v180, 0
        %vm183 = vcmp.lt.s32.totalorder %v173, 0
        %vm184 = vcmp.lt.s32.totalorder %v180, 0
        %vm185 = vmand %vm183, %vm181
        %vm186 = vmand %vm184, %vm182
        %v187 = vadd.s32 %v173, 16
        %v188 = vadd.s32 %v180, 16
        %v189 = vsel %vm185, %v187, %v173
        %v190 = vsel %vm186, %v188, %v180
        %vm191 = vcmp.ge.s32.totalorder %v189, 12
        %vm192 = vcmp.ge.s32.totalorder %v190, 12
        %v194 = vsel %vm191, %v159, %v151
        %v195 = vsel %vm192, %v163, %v153
        %197 = vrot.lane.b32.xlu0 %v195, 68
        %v198 = vpop.permute.xlu0 %197
        %vm200 = vcmask 551936
        %201 = vst.msk [vmem:[%s150] sm:$0xf] %vm200, %v198
        %v203 = vcombine.low %v194, %v195
        %204 = vrot.lane.b32.xlu0 %v203, 68
        %v205 = vpop.permute.xlu0 %204
        %v206 = vrot.slane %v205, 4
        %vm207 = vcmask 556032
        %v208 = vsel %vm207, %v206, %v205
        %vm210 = vcmask 1044000
        %vm211 = vcmask 1047556
        %vm212 = vmor %vm211, %vm210
        %213 = vst.msk [vmem:[%s150] sm:$0xff] %vm212, %v208
        %s214 = sand.u32 %s68, 1
        %s215 = scalar_lea.sflag [#allocation4], %s214
        %s216 = sand.u32 %s68, 1
        %s217 = smul.addr %s216, 8
        %s218 = scalar_lea.vmem [#allocation5], %s217
        // Predicated region
        $region29: #{tpu_custom_call.1} parent=23 // pred_check
          %p219 = pneg %p78
        $region30: #{tpu_custom_call.1} parent=23 // pred_check_branch
          %221 = sbr.rel (%p219) target = $region32
        $region31: #{tpu_custom_call.1} parent=23 // pred_region
          %s223 = ssub.s32 128, 128
          %224 = vsyncadd %s215, %s223
          %s225 = smul.addr %s23, 2
          %s226 = smul.addr %s22, 2
          %s227 = sadd.s32 %s225, %s226
          %s228 = smul.addr %s227, 64
          %s229 = scalar_lea.hbm %s1, %s228
          %s231 = sshll.u32 %s218, 4
          %s232 = int_to_ptr.vmem [resolvable:$true] %s231
          %234 = dma.vmem_to_hbm [thread:$0]  %s232, 128, %s229, %s215
        $region32: #{tpu_custom_call.1} parent=23 // pred_fallthru
          _
      $region24: #{tpu_custom_call.1} parent=5 // pred_fallthru
        _
      %p235 = scmp.le.s32.totalorder 2, %s13
      // Predicated region
      $region33: #{tpu_custom_call.1} parent=5 // pred_check
        %p236 = pneg %p235
      $region34: #{tpu_custom_call.1} parent=5 // pred_check_branch
        %238 = sbr.rel (%p236) target = $region36
      $region35: #{tpu_custom_call.1} parent=5 // pred_region
        %s239 = ssub.s32 %s13, 2
        // Predicated region
        $region37: #{tpu_custom_call.1} parent=35 // pred_check
          %p240 = pneg %p84
        $region38: #{tpu_custom_call.1} parent=35 // pred_check_branch
          %242 = sbr.rel (%p240) target = $region40
        $region39: #{tpu_custom_call.1} parent=35 // pred_region
          %s243 = sand.u32 %s69, 1
          %s244 = scalar_lea.sflag [#allocation4], %s243
          %s245 = sand.u32 %s69, 1
          %s246 = smul.addr %s245, 8
          %s247 = scalar_lea.vmem [#allocation5], %s246
          %248 = dma.done %s244, 128
        $region40: #{tpu_custom_call.1} parent=35 // pred_fallthru
          _
      $region36: #{tpu_custom_call.1} parent=5 // pred_fallthru
        _
    $region6: #{tpu_custom_call.1} parent=1 // loop_footer
      %s17 = sadd.s32 1, %s13
    $region7: #{tpu_custom_call.1} parent=1 // loop_footer_branch
      %12 = sbr.rel target = $region3
    $region8: #{tpu_custom_call.1} parent=1 // loop_exit
      _
    %249 = vsyncpa [#allocation3], 1
    %s250 = scalar_lea.sflag [#allocation3], 1
    %251 = vsyncpa %s250, 1
    %252 = vsyncpa [#allocation4], 1
    %s253 = scalar_lea.sflag [#allocation4], 1
    %254 = vsyncpa %s253, 1

</llo_original>
